<compile_context>
chip_gen: v7x
topology: tpu7x:2x2x1
jax: 0.10.0
libtpu: 0.0.40
codegen_flags: <defaults>
</compile_context>

<pallas_src>
import jax
import jax.numpy as jnp
from jax.experimental import pallas as pl
from jax.experimental.pallas import tpu as pltpu


# ---------------------------------------------------------------------------
# Kernel
# ---------------------------------------------------------------------------
def _embed_kernel(ids_ref, table_ref, out_ref):
    # ids_ref:   VMEM int32 [T, 1]        token ids for this token block
    # table_ref: VMEM      [P, D_BLOCK]   embedding-table slab (resident per D step)
    # out_ref:   VMEM      [T, D_BLOCK]   dense output tile
    t = ids_ref.shape[0]
    p = table_ref.shape[0]
    ids = ids_ref[...]                                        # (T, 1)
    cols = jax.lax.broadcasted_iota(jnp.int32, (t, p), 1)     # (T, P)
    onehot = (cols == ids).astype(table_ref.dtype)            # (T, P) one-hot rows
    # f32 tables need HIGHEST for bit-exact selection through the MXU; bf16
    # tables are exact in a single default pass (0/1 * bf16, f32 accumulate).
    prec = (jax.lax.Precision.HIGHEST
            if table_ref.dtype == jnp.float32 else jax.lax.Precision.DEFAULT)
    acc = jnp.dot(onehot, table_ref[...],
                  preferred_element_type=jnp.float32, precision=prec)
    out_ref[...] = acc.astype(out_ref.dtype)


# ---------------------------------------------------------------------------
# Sizing helpers
# ---------------------------------------------------------------------------
def _round_up(x, m):
    return (x + m - 1) // m * m


def _max_tok_block():
    """256 on v6e/v7x (2x256 MXU), 128 on earlier generations."""
    try:
        kind = jax.devices()[0].device_kind.lower()
    except Exception:
        return 128
    if "v6" in kind or "v7" in kind:
        return 256
    return 128


def _vmem_budget_bytes():
    """Generation-aware working-set budget (well below physical VMEM)."""
    phys = None
    try:
        info = pltpu.get_tpu_info()
        phys = getattr(info, "vmem_capacity_bytes", None)
    except Exception:
        phys = None
    if phys is None:
        phys = 64 * 1024 * 1024          # assume the tightest generation (v7x)
    if phys >= 128 * 1024 * 1024:        # v5e / v6e
        return 72 * 1024 * 1024
    return 40 * 1024 * 1024              # v7x: 64 MiB physical per TC


def _vmem_need(p, d_block, tok_block, itemsize, table_bufs):
    """Estimated resident VMEM for one grid step (bytes)."""
    lanes_p = max(p, 128)
    table = table_bufs * p * d_block * itemsize       # table slab buffer(s)
    out = 2 * tok_block * d_block * itemsize          # double-buffered out tile
    ids = 2 * tok_block * 128 * 4                     # int32 ids, lane-padded
    onehot = tok_block * lanes_p * itemsize           # one-hot temporary
    iota = tok_block * lanes_p * 4                    # int32 iota / compare temp
    acc = tok_block * d_block * 4                     # f32 MXU result
    return table + out + ids + onehot + iota + acc


def _pick_d_block(dp, p, tok_block, itemsize, budget_bytes, table_bufs):
    """Largest multiple of 128 dividing Dp whose working set fits the budget."""
    best = 128
    for cand in range(128, dp + 1, 128):
        if dp % cand != 0:
            continue
        if _vmem_need(p, cand, tok_block, itemsize, table_bufs) <= budget_bytes:
            best = cand
    return best


def _pick_tok_block(n, max_tb):
    """Prefer a divisor of n (multiple of 8, <= max_tb) so no depad copy is needed."""
    best = None
    for cand in range(8, min(max_tb, n) + 1, 8):
        if n % cand == 0:
            best = cand
    if best is not None and (best * 2 >= max_tb or best == n):
        return best, 0
    tb = min(max_tb, _round_up(n, 8))
    pad = (-n) % tb
    return tb, pad


# ---------------------------------------------------------------------------
# Forward wrapper
# ---------------------------------------------------------------------------
def prefix_encoder_forward(prefix_tokens, embedding_table, out_dtype=None):
    """prefix_tokens: int [B, L]; embedding_table: [P, D] -> [B, L, D] (table dtype).

    Out-of-range / negative ids yield an all-zero row (PyTorch nn.Embedding
    leaves this undefined).
    """
    B, L = prefix_tokens.shape
    P, D = embedding_table.shape
    if out_dtype is None:
        out_dtype = embedding_table.dtype

    flat_ids = prefix_tokens.reshape(-1).astype(jnp.int32)
    N = B * L

    # Token blocking (prefer a divisor of N so no depad copy is issued).
    tok_block, pad = _pick_tok_block(N, _max_tok_block())
    if pad:
        flat_ids = jnp.concatenate([flat_ids, jnp.zeros((pad,), jnp.int32)])
    Np = N + pad
    ids_2d = flat_ids.reshape(Np, 1)

    # Pad D to a lane multiple so every block width is legal and bounded.
    Dp = _round_up(D, 128)
    table = embedding_table
    if Dp != D:
        table = jnp.pad(table, ((0, 0), (0, Dp - D)))

    itemsize = jnp.dtype(table.dtype).itemsize
    budget = _vmem_budget_bytes()

    # Choose D block; single-buffer the table slab only when that actually
    # unlocks a larger block (its block index is constant across the token loop).
    d_db = _pick_d_block(Dp, P, tok_block, itemsize, budget, table_bufs=2)
    d_sb = _pick_d_block(Dp, P, tok_block, itemsize, budget, table_bufs=1)

    table_map = lambda d, g: (0, d)
    d_block = d_db
    table_bufs = 2
    table_spec = pl.BlockSpec((P, d_db), table_map)
    if d_sb > d_db and hasattr(pl, "Buffered"):
        try:
            table_spec = pl.BlockSpec((P, d_sb), table_map,
                                      pipeline_mode=pl.Buffered(1))
            d_block = d_sb
            table_bufs = 1
        except TypeError:
            pass  # older BlockSpec without pipeline_mode: keep double-buffered slab

    need = _vmem_need(P, d_block, tok_block, itemsize, table_bufs)
    vmem_limit = 2 * need + (8 << 20)          # headroom for compiler scratch
    vmem_limit = max(vmem_limit, 16 << 20)     # floor (safe on every generation)
    vmem_limit = min(vmem_limit, budget)       # generation-aware cap
    vmem_limit = int(max(vmem_limit, need + (2 << 20)))

    grid = (Dp // d_block, Np // tok_block)    # D slab outer, token block inner

    out = pl.pallas_call(
        _embed_kernel,
        out_shape=jax.ShapeDtypeStruct((Np, Dp), out_dtype),
        grid_spec=pltpu.PrefetchScalarGridSpec(
            num_scalar_prefetch=0,
            grid=grid,
            in_specs=[
                pl.BlockSpec((tok_block, 1), lambda d, g: (g, 0)),
                table_spec,
            ],
            out_specs=pl.BlockSpec((tok_block, d_block), lambda d, g: (g, d)),
        ),
        compiler_params=pltpu.CompilerParams(
            # D (outer) axis parallel -> megacore shards disjoint table slabs;
            # token axis arbitrary -> table slab read exactly once per slab.
            dimension_semantics=("parallel", "arbitrary"),
            vmem_limit_bytes=vmem_limit,
        ),
    )(ids_2d, table)

    if pad or Dp != D:
        out = out[:N, :D]
    return out.reshape(B, L, D)


# ---------------------------------------------------------------------------
# Demo / self-check
# ---------------------------------------------------------------------------
if __name__ == "__main__":
    # Small shapes consistent with the module.
    batch = 2
    pre_seq_len = 8
    num_hidden_layers = 2
    hidden_size = 32
    D = num_hidden_layers * 2 * hidden_size  # 128

    key = jax.random.PRNGKey(0)
    k_emb, _ = jax.random.split(key)

    # Deterministic parameter init (nn.Embedding default: N(0, 1)).
    embedding_table = jax.random.normal(k_emb, (pre_seq_len, D), dtype=jnp.float32)

    # Typical prefix tokens: arange(pre_seq_len) broadcast over the batch.
    prefix_tokens = jnp.broadcast_to(
        jnp.arange(pre_seq_len, dtype=jnp.int32)[None, :], (batch, pre_seq_len)
    )

    # f32 path (matches the PyTorch module's default dtype / semantics).
    out = prefix_encoder_forward(prefix_tokens, embedding_table)
    out = jax.block_until_ready(out)
    ref = jnp.take(embedding_table, prefix_tokens.reshape(-1), axis=0).reshape(
        batch, pre_seq_len, D
    )
    assert out.shape == (batch, pre_seq_len, D), out.shape
    assert out.dtype == jnp.float32
    assert jnp.allclose(out, ref), "f32 path mismatch vs reference gather"

    # bf16 path (halved HBM traffic when the prefix table is stored in bf16).
    table_bf16 = embedding_table.astype(jnp.bfloat16)
    out_bf16 = prefix_encoder_forward(prefix_tokens, table_bf16)
    out_bf16 = jax.block_until_ready(out_bf16)
    ref_bf16 = jnp.take(table_bf16, prefix_tokens.reshape(-1), axis=0).reshape(
        batch, pre_seq_len, D
    )
    assert out_bf16.dtype == jnp.bfloat16
    assert jnp.array_equal(
        out_bf16.astype(jnp.float32), ref_bf16.astype(jnp.float32)
    ), "bf16 path mismatch vs reference gather"

    print("KERNEL_OK")
</pallas_src>

<mosaic_0001>
module attributes {stable_mosaic.version = 11 : i64} {
  func.func @_embed_kernel(%arg0: i32, %arg1: i32, %arg2: memref<16x1xi32, #tpu.memory_space<vmem>>, %arg3: memref<8x128xf32, #tpu.memory_space<vmem>>, %arg4: memref<16x128xf32, #tpu.memory_space<vmem>>) attributes {dimension_semantics = [#tpu.dimension_semantics<parallel>, #tpu.dimension_semantics<arbitrary>], iteration_bounds = array<i64: 1, 1>, scalar_prefetch = 0 : i64, scratch_operands = 0 : i64, tpu.core_type = #tpu.core_type<tc>, window_params = [{transform_indices = @transform_0, window_bounds = array<i64: 16, 1>}, {transform_indices = @transform_1, window_bounds = array<i64: 8, 128>}, {transform_indices = @transform_2, window_bounds = array<i64: 16, 128>}]} {
    %c0 = arith.constant 0 : index
    %c0_0 = arith.constant 0 : index
    %0 = vector.load %arg2[%c0, %c0_0] : memref<16x1xi32, #tpu.memory_space<vmem>>, vector<16x1xi32>
    %1 = tpu.iota {dimensions = array<i32: 1>} : vector<16x8xi32>
    %2 = vector.broadcast %0 : vector<16x1xi32> to vector<16x8xi32>
    %3 = arith.cmpi eq, %1, %2 : vector<16x8xi32>
    %4 = arith.extui %3 : vector<16x8xi1> to vector<16x8xi32>
    %5 = arith.sitofp %4 : vector<16x8xi32> to vector<16x8xf32>
    %c0_1 = arith.constant 0 : index
    %c0_2 = arith.constant 0 : index
    %6 = vector.load %arg3[%c0_1, %c0_2] : memref<8x128xf32, #tpu.memory_space<vmem>>, vector<8x128xf32>
    %cst = arith.constant dense<0.000000e+00> : vector<16x128xf32>
    %7 = tpu.matmul %5, %6, %cst {dimension_numbers = #tpu.dot_dimension_numbers<[1], [0], [0], [1], [0, 0, 1, 1], [], []>, precision = #tpu.contract_precision<fp32>} : vector<16x8xf32>, vector<8x128xf32>, vector<16x128xf32> -> vector<16x128xf32>
    %c0_3 = arith.constant 0 : index
    %c0_4 = arith.constant 0 : index
    %8 = vector.load %arg4[%c0_3, %c0_4] : memref<16x128xf32, #tpu.memory_space<vmem>>, vector<16x128xf32>
    tpu.vector_store %arg4[%c0_3, %c0_4], %7 {strides = array<i32>} : memref<16x128xf32, #tpu.memory_space<vmem>>, vector<16x128xf32>,
    return
  }
  func.func @transform_0(%arg0: i32, %arg1: i32) -> (i32, i32) {
    %c0_i32 = arith.constant 0 : i32
    %c0_i32_0 = arith.constant 0 : i32
    return %arg1, %c0_i32 : i32, i32
  }
  func.func @transform_1(%arg0: i32, %arg1: i32) -> (i32, i32) {
    %c0_i32 = arith.constant 0 : i32
    %c0_i32_0 = arith.constant 0 : i32
    return %c0_i32, %arg0 : i32, i32
  }
  func.func @transform_2(%arg0: i32, %arg1: i32) -> (i32, i32) {
    %c0_i32 = arith.constant 0 : i32
    return %arg1, %arg0 : i32, i32
  }
}

</mosaic_0001>

<llo_original>
// kernel: tpu_custom_call.1
$region0: #{tpu_custom_call.1}
  #allocation0 [shape = 'u32[]', space=smem, size = 0x4, offset = 0x4, fixed_abs, tag = 'smem constant byte address 0x4 - core index']
  #allocation1 [shape = 'u32[144,128]{1,0:T(1,128)}', space=vmem, size = 0x12000, scoped, tag = 'internal scratch']
  %s0 = inlined_call_operand.vmem [shape: s32[16,1], index: 0, kind: input, shape index: {}]
  %s1 = inlined_call_operand.vmem [shape: f32[8,128], index: 1, kind: input, shape index: {}]
  %s2 = inlined_call_operand.hbm [shape: f32[16,128], index: 2, kind: output, shape index: {}]
  %s3 = sld [smem:[#allocation0]]
  $region18: #{tpu_custom_call.1} parent=0
    _
  %s5 = ssub.s32 1, %s3
  %s6 = scalar_select 0, %s5, %s3
  $region1: #{tpu_custom_call.1} parent=0
    #allocation2 [shape = 'u8[8192]{0}', space=vmem, size = 0x2000, scoped, tag = 'output window, operand 0, single buffered']
    #allocation3 [shape = 's32[1]{0}', space=sflag, size = 0x4, scoped, tag = 'scoped memory for tpu_custom_call.1']
    %7 = vsyncpa [#allocation3], 0
    // Predicated region
    $region2: #{tpu_custom_call.1} parent=1 // pred_check
      _
    $region3: #{tpu_custom_call.1} parent=1 // pred_check_branch
      %9 = sbr.rel (0) target = $region5
    $region4: #{tpu_custom_call.1} parent=1 // pred_region
      _
    $region5: #{tpu_custom_call.1} parent=1 // pred_fallthru
      _
    // Predicated region
    $region6: #{tpu_custom_call.1} parent=1 // pred_check
      _
    $region7: #{tpu_custom_call.1} parent=1 // pred_check_branch
      %11 = sbr.rel (0) target = $region9
    $region8: #{tpu_custom_call.1} parent=1 // pred_region
      _
    $region9: #{tpu_custom_call.1} parent=1 // pred_fallthru
      _
    %v12 = vld [vmem:[%s0] sm:$0xff]
    %v13 = vld [vmem:[%s0 + $0x8] sm:$0xff]
    %v14 = vlaneseq
    %v15 = vand.u32 %v14, 127
    %16 = vset.pattern.permute.xlu0 0
    %17 = vperm.xlu0 %16, %v12
    %v18 = vpop.permute.xlu0 %17
    %19 = vset.pattern.permute.xlu0 0
    %20 = vperm.xlu0 %19, %v13
    %v21 = vpop.permute.xlu0 %20
    %vm22 = vcmp.eq.s32.totalorder %v15, %v18
    %vm23 = vcmp.eq.s32.totalorder %v15, %v21
    %v24 = vsel %vm22, 1, 0
    %v25 = vsel %vm23, 1, 0
    %v26 = vcvt.s32.f32 %v24
    %v27 = vcvt.s32.f32 %v25
    %v28 = vld [vmem:[%s1] sm:$0xff]
    %vm29 = vcmask 64512
    %v31 = vsel %vm29, %v26, 0
    %v34 = vsel %vm29, %v27, 0
    %36 = vmatprep.subr.mxu0 0.0
    %v37 = vand.u32 %v28, 4294901760
    %38 = vmatpush1.msra.mxu0 %v37
    %39 = vmatprep.subr.mxu0 0.0
    %40 = vmatpush1.msra.mxu0 0.0
    %41 = vmatprep.subr.mxu0 0.0
    %42 = vmatpush1.msra.mxu0 0.0
    %43 = vmatprep.subr.mxu0 0.0
    %44 = vmatpush1.msra.mxu0 0.0
    %45 = vmatprep.subr.mxu0 0.0
    %46 = vmatpush1.msra.mxu0 0.0
    %47 = vmatprep.subr.mxu0 0.0
    %48 = vmatpush1.msra.mxu0 0.0
    %49 = vmatprep.subr.mxu0 0.0
    %50 = vmatpush1.msra.mxu0 0.0
    %51 = vmatprep.subr.mxu0 0.0
    %52 = vmatpush1.msra.mxu0 0.0
    %53 = vmatprep.subr.mxu0 0.0
    %54 = vmatpush1.msra.mxu0 0.0
    %55 = vmatprep.subr.mxu0 0.0
    %56 = vmatpush1.msra.mxu0 0.0
    %57 = vmatprep.subr.mxu0 0.0
    %58 = vmatpush1.msra.mxu0 0.0
    %59 = vmatprep.subr.mxu0 0.0
    %60 = vmatpush1.msra.mxu0 0.0
    %61 = vmatprep.subr.mxu0 0.0
    %62 = vmatpush1.msra.mxu0 0.0
    %63 = vmatprep.subr.mxu0 0.0
    %64 = vmatpush1.msra.mxu0 0.0
    %65 = vmatprep.subr.mxu0 0.0
    %66 = vmatpush1.msra.mxu0 0.0
    %67 = vmatprep.subr.mxu0 0.0
    %68 = vmatpush1.msra.mxu0 0.0
    %69 = vmatprep.subr.mxu0 0.0
    %70 = vmatpush1.msra.mxu0 0.0
    %71 = vmatprep.subr.mxu0 0.0
    %72 = vmatpush1.msra.mxu0 0.0
    %73 = vmatprep.subr.mxu0 0.0
    %74 = vmatpush1.msra.mxu0 0.0
    %75 = vmatprep.subr.mxu0 0.0
    %76 = vmatpush1.msra.mxu0 0.0
    %77 = vmatprep.subr.mxu0 0.0
    %78 = vmatpush1.msra.mxu0 0.0
    %79 = vmatprep.subr.mxu0 0.0
    %80 = vmatpush1.msra.mxu0 0.0
    %81 = vmatprep.subr.mxu0 0.0
    %82 = vmatpush1.msra.mxu0 0.0
    %83 = vmatprep.subr.mxu0 0.0
    %84 = vmatpush1.msra.mxu0 0.0
    %85 = vmatprep.subr.mxu0 0.0
    %86 = vmatpush1.msra.mxu0 0.0
    %87 = vmatprep.subr.mxu0 0.0
    %88 = vmatpush1.msra.mxu0 0.0
    %89 = vmatprep.subr.mxu0 0.0
    %90 = vmatpush1.msra.mxu0 0.0
    %91 = vmatprep.subr.mxu0 0.0
    %92 = vmatpush1.msra.mxu0 0.0
    %93 = vmatprep.subr.mxu0 0.0
    %94 = vmatpush1.msra.mxu0 0.0
    %95 = vmatprep.subr.mxu0 0.0
    %96 = vmatpush1.msra.mxu0 0.0
    %97 = vmatprep.subr.mxu0 0.0
    %98 = vmatpush1.msra.mxu0 0.0
    %99 = vmatprep.subr.mxu0 0.0
    %100 = vmatpush1.msra.mxu0 0.0
    %101 = vmatprep.mubr.f32.mxu0 0.0
    %v102 = vand.u32 %v31, 4294901760
    %v103 = vsub.f32 %v31, %v102
    %v104 = vand.u32 %v103, 4294901760
    %v105 = vsub.f32 %v103, %v104
    %v106 = vand.u32 %v105, 4294901760
    %107 = vmatmul.mubr.f32.gmra.mrb[0].mxu0 %v106
    %v108 = vpop.f32.mrb[0].mxu0
    %v109 = vadd.f32 0.0, %v108
    %v110 = vpop.f32.mrb[0].mxu0
    %111 = vmatprep.mubr.f32.mxu0 0.0
    %v112 = vand.u32 %v34, 4294901760
    %v113 = vsub.f32 %v34, %v112
    %v114 = vand.u32 %v113, 4294901760
    %v115 = vsub.f32 %v113, %v114
    %v116 = vand.u32 %v115, 4294901760
    %117 = vmatmul.mubr.f32.gmra.mrb[0].mxu0 %v116
    %v118 = vpop.f32.mrb[0].mxu0
    %v119 = vadd.f32 0.0, %v118
    %v120 = vpop.f32.mrb[0].mxu0
    %121 = vdwg.mxu0
    %122 = vmatprep.subr.mxu0 0.0
    %v123 = vand.u32 %v28, 4294901760
    %v124 = vsub.f32 %v28, %v123
    %v125 = vand.u32 %v124, 4294901760
    %v126 = vsub.f32 %v124, %v125
    %v127 = vand.u32 %v126, 4294901760
    %128 = vmatpush1.msra.mxu0 %v127
    %129 = vmatprep.subr.mxu0 0.0
    %130 = vmatpush1.msra.mxu0 0.0
    %131 = vmatprep.subr.mxu0 0.0
    %132 = vmatpush1.msra.mxu0 0.0
    %133 = vmatprep.subr.mxu0 0.0
    %134 = vmatpush1.msra.mxu0 0.0
    %135 = vmatprep.subr.mxu0 0.0
    %136 = vmatpush1.msra.mxu0 0.0
    %137 = vmatprep.subr.mxu0 0.0
    %138 = vmatpush1.msra.mxu0 0.0
    %139 = vmatprep.subr.mxu0 0.0
    %140 = vmatpush1.msra.mxu0 0.0
    %141 = vmatprep.subr.mxu0 0.0
    %142 = vmatpush1.msra.mxu0 0.0
    %143 = vmatprep.subr.mxu0 0.0
    %144 = vmatpush1.msra.mxu0 0.0
    %145 = vmatprep.subr.mxu0 0.0
    %146 = vmatpush1.msra.mxu0 0.0
    %147 = vmatprep.subr.mxu0 0.0
    %148 = vmatpush1.msra.mxu0 0.0
    %149 = vmatprep.subr.mxu0 0.0
    %150 = vmatpush1.msra.mxu0 0.0
    %151 = vmatprep.subr.mxu0 0.0
    %152 = vmatpush1.msra.mxu0 0.0
    %153 = vmatprep.subr.mxu0 0.0
    %154 = vmatpush1.msra.mxu0 0.0
    %155 = vmatprep.subr.mxu0 0.0
    %156 = vmatpush1.msra.mxu0 0.0
    %157 = vmatprep.subr.mxu0 0.0
    %158 = vmatpush1.msra.mxu0 0.0
    %159 = vmatprep.subr.mxu0 0.0
    %160 = vmatpush1.msra.mxu0 0.0
    %161 = vmatprep.subr.mxu0 0.0
    %162 = vmatpush1.msra.mxu0 0.0
    %163 = vmatprep.subr.mxu0 0.0
    %164 = vmatpush1.msra.mxu0 0.0
    %165 = vmatprep.subr.mxu0 0.0
    %166 = vmatpush1.msra.mxu0 0.0
    %167 = vmatprep.subr.mxu0 0.0
    %168 = vmatpush1.msra.mxu0 0.0
    %169 = vmatprep.subr.mxu0 0.0
    %170 = vmatpush1.msra.mxu0 0.0
    %171 = vmatprep.subr.mxu0 0.0
    %172 = vmatpush1.msra.mxu0 0.0
    %173 = vmatprep.subr.mxu0 0.0
    %174 = vmatpush1.msra.mxu0 0.0
    %175 = vmatprep.subr.mxu0 0.0
    %176 = vmatpush1.msra.mxu0 0.0
    %177 = vmatprep.subr.mxu0 0.0
    %178 = vmatpush1.msra.mxu0 0.0
    %179 = vmatprep.subr.mxu0 0.0
    %180 = vmatpush1.msra.mxu0 0.0
    %181 = vmatprep.subr.mxu0 0.0
    %182 = vmatpush1.msra.mxu0 0.0
    %183 = vmatprep.subr.mxu0 0.0
    %184 = vmatpush1.msra.mxu0 0.0
    %185 = vmatprep.subr.mxu0 0.0
    %186 = vmatpush1.msra.mxu0 0.0
    %187 = vmatprep.subr.mxu0 0.0
    %188 = vmatpush1.msra.mxu0 0.0
    %189 = vmatprep.subr.mxu0 0.0
    %190 = vmatpush1.msra.mxu0 0.0
    %191 = vmatprep.mubr.f32.mxu0 0.0
    %v192 = vand.u32 %v31, 4294901760
    %193 = vmatmul.mubr.f32.gmra.mrb[0].mxu0 %v192
    %v194 = vpop.f32.mrb[0].mxu0
    %v195 = vadd.f32 %v109, %v194
    %v196 = vpop.f32.mrb[0].mxu0
    %197 = vmatprep.mubr.f32.mxu0 0.0
    %v198 = vand.u32 %v34, 4294901760
    %199 = vmatmul.mubr.f32.gmra.mrb[0].mxu0 %v198
    %v200 = vpop.f32.mrb[0].mxu0
    %v201 = vadd.f32 %v119, %v200
    %v202 = vpop.f32.mrb[0].mxu0
    %203 = vdwg.mxu0
    %204 = vmatprep.subr.mxu0 0.0
    %v205 = vand.u32 %v28, 4294901760
    %v206 = vsub.f32 %v28, %v205
    %207 = vmatpush1.msra.mxu0 %v206
    %208 = vmatprep.subr.mxu0 0.0
    %209 = vmatpush1.msra.mxu0 0.0
    %210 = vmatprep.subr.mxu0 0.0
    %211 = vmatpush1.msra.mxu0 0.0
    %212 = vmatprep.subr.mxu0 0.0
    %213 = vmatpush1.msra.mxu0 0.0
    %214 = vmatprep.subr.mxu0 0.0
    %215 = vmatpush1.msra.mxu0 0.0
    %216 = vmatprep.subr.mxu0 0.0
    %217 = vmatpush1.msra.mxu0 0.0
    %218 = vmatprep.subr.mxu0 0.0
    %219 = vmatpush1.msra.mxu0 0.0
    %220 = vmatprep.subr.mxu0 0.0
    %221 = vmatpush1.msra.mxu0 0.0
    %222 = vmatprep.subr.mxu0 0.0
    %223 = vmatpush1.msra.mxu0 0.0
    %224 = vmatprep.subr.mxu0 0.0
    %225 = vmatpush1.msra.mxu0 0.0
    %226 = vmatprep.subr.mxu0 0.0
    %227 = vmatpush1.msra.mxu0 0.0
    %228 = vmatprep.subr.mxu0 0.0
    %229 = vmatpush1.msra.mxu0 0.0
    %230 = vmatprep.subr.mxu0 0.0
    %231 = vmatpush1.msra.mxu0 0.0
    %232 = vmatprep.subr.mxu0 0.0
    %233 = vmatpush1.msra.mxu0 0.0
    %234 = vmatprep.subr.mxu0 0.0
    %235 = vmatpush1.msra.mxu0 0.0
    %236 = vmatprep.subr.mxu0 0.0
    %237 = vmatpush1.msra.mxu0 0.0
    %238 = vmatprep.subr.mxu0 0.0
    %239 = vmatpush1.msra.mxu0 0.0
    %240 = vmatprep.subr.mxu0 0.0
    %241 = vmatpush1.msra.mxu0 0.0
    %242 = vmatprep.subr.mxu0 0.0
    %243 = vmatpush1.msra.mxu0 0.0
    %244 = vmatprep.subr.mxu0 0.0
    %245 = vmatpush1.msra.mxu0 0.0
    %246 = vmatprep.subr.mxu0 0.0
    %247 = vmatpush1.msra.mxu0 0.0
    %248 = vmatprep.subr.mxu0 0.0
    %249 = vmatpush1.msra.mxu0 0.0
    %250 = vmatprep.subr.mxu0 0.0
    %251 = vmatpush1.msra.mxu0 0.0
    %252 = vmatprep.subr.mxu0 0.0
    %253 = vmatpush1.msra.mxu0 0.0
    %254 = vmatprep.subr.mxu0 0.0
    %255 = vmatpush1.msra.mxu0 0.0
    %256 = vmatprep.subr.mxu0 0.0
    %257 = vmatpush1.msra.mxu0 0.0
    %258 = vmatprep.subr.mxu0 0.0
    %259 = vmatpush1.msra.mxu0 0.0
    %260 = vmatprep.subr.mxu0 0.0
    %261 = vmatpush1.msra.mxu0 0.0
    %262 = vmatprep.subr.mxu0 0.0
    %263 = vmatpush1.msra.mxu0 0.0
    %264 = vmatprep.subr.mxu0 0.0
    %265 = vmatpush1.msra.mxu0 0.0
    %266 = vmatprep.subr.mxu0 0.0
    %267 = vmatpush1.msra.mxu0 0.0
    %268 = vmatprep.subr.mxu0 0.0
    %269 = vmatpush1.msra.mxu0 0.0
    %270 = vmatprep.mubr.f32.mxu0 0.0
    %v271 = vand.u32 %v31, 4294901760
    %v272 = vsub.f32 %v31, %v271
    %273 = vmatmul.mubr.f32.gmra.mrb[0].mxu0 %v272
    %v274 = vpop.f32.mrb[0].mxu0
    %v275 = vadd.f32 %v195, %v274
    %v276 = vpop.f32.mrb[0].mxu0
    %277 = vmatprep.mubr.f32.mxu0 0.0
    %v278 = vand.u32 %v34, 4294901760
    %v279 = vsub.f32 %v34, %v278
    %280 = vmatmul.mubr.f32.gmra.mrb[0].mxu0 %v279
    %v281 = vpop.f32.mrb[0].mxu0
    %v282 = vadd.f32 %v201, %v281
    %v283 = vpop.f32.mrb[0].mxu0
    %284 = vdwg.mxu0
    %285 = vmatprep.subr.mxu0 0.0
    %v286 = vand.u32 %v28, 4294901760
    %287 = vmatpush1.msra.mxu0 %v286
    %288 = vmatprep.subr.mxu0 0.0
    %289 = vmatpush1.msra.mxu0 0.0
    %290 = vmatprep.subr.mxu0 0.0
    %291 = vmatpush1.msra.mxu0 0.0
    %292 = vmatprep.subr.mxu0 0.0
    %293 = vmatpush1.msra.mxu0 0.0
    %294 = vmatprep.subr.mxu0 0.0
    %295 = vmatpush1.msra.mxu0 0.0
    %296 = vmatprep.subr.mxu0 0.0
    %297 = vmatpush1.msra.mxu0 0.0
    %298 = vmatprep.subr.mxu0 0.0
    %299 = vmatpush1.msra.mxu0 0.0
    %300 = vmatprep.subr.mxu0 0.0
    %301 = vmatpush1.msra.mxu0 0.0
    %302 = vmatprep.subr.mxu0 0.0
    %303 = vmatpush1.msra.mxu0 0.0
    %304 = vmatprep.subr.mxu0 0.0
    %305 = vmatpush1.msra.mxu0 0.0
    %306 = vmatprep.subr.mxu0 0.0
    %307 = vmatpush1.msra.mxu0 0.0
    %308 = vmatprep.subr.mxu0 0.0
    %309 = vmatpush1.msra.mxu0 0.0
    %310 = vmatprep.subr.mxu0 0.0
    %311 = vmatpush1.msra.mxu0 0.0
    %312 = vmatprep.subr.mxu0 0.0
    %313 = vmatpush1.msra.mxu0 0.0
    %314 = vmatprep.subr.mxu0 0.0
    %315 = vmatpush1.msra.mxu0 0.0
    %316 = vmatprep.subr.mxu0 0.0
    %317 = vmatpush1.msra.mxu0 0.0
    %318 = vmatprep.subr.mxu0 0.0
    %319 = vmatpush1.msra.mxu0 0.0
    %320 = vmatprep.subr.mxu0 0.0
    %321 = vmatpush1.msra.mxu0 0.0
    %322 = vmatprep.subr.mxu0 0.0
    %323 = vmatpush1.msra.mxu0 0.0
    %324 = vmatprep.subr.mxu0 0.0
    %325 = vmatpush1.msra.mxu0 0.0
    %326 = vmatprep.subr.mxu0 0.0
    %327 = vmatpush1.msra.mxu0 0.0
    %328 = vmatprep.subr.mxu0 0.0
    %329 = vmatpush1.msra.mxu0 0.0
    %330 = vmatprep.subr.mxu0 0.0
    %331 = vmatpush1.msra.mxu0 0.0
    %332 = vmatprep.subr.mxu0 0.0
    %333 = vmatpush1.msra.mxu0 0.0
    %334 = vmatprep.subr.mxu0 0.0
    %335 = vmatpush1.msra.mxu0 0.0
    %336 = vmatprep.subr.mxu0 0.0
    %337 = vmatpush1.msra.mxu0 0.0
    %338 = vmatprep.subr.mxu0 0.0
    %339 = vmatpush1.msra.mxu0 0.0
    %340 = vmatprep.subr.mxu0 0.0
    %341 = vmatpush1.msra.mxu0 0.0
    %342 = vmatprep.subr.mxu0 0.0
    %343 = vmatpush1.msra.mxu0 0.0
    %344 = vmatprep.subr.mxu0 0.0
    %345 = vmatpush1.msra.mxu0 0.0
    %346 = vmatprep.subr.mxu0 0.0
    %347 = vmatpush1.msra.mxu0 0.0
    %348 = vmatprep.subr.mxu0 0.0
    %349 = vmatpush1.msra.mxu0 0.0
    %350 = vmatprep.mubr.f32.mxu0 0.0
    %v351 = vand.u32 %v31, 4294901760
    %v352 = vsub.f32 %v31, %v351
    %v353 = vand.u32 %v352, 4294901760
    %354 = vmatmul.mubr.f32.gmra.mrb[0].mxu0 %v353
    %v355 = vpop.f32.mrb[0].mxu0
    %v356 = vadd.f32 %v275, %v355
    %v357 = vpop.f32.mrb[0].mxu0
    %358 = vmatprep.mubr.f32.mxu0 0.0
    %v359 = vand.u32 %v34, 4294901760
    %v360 = vsub.f32 %v34, %v359
    %v361 = vand.u32 %v360, 4294901760
    %362 = vmatmul.mubr.f32.gmra.mrb[0].mxu0 %v361
    %v363 = vpop.f32.mrb[0].mxu0
    %v364 = vadd.f32 %v282, %v363
    %v365 = vpop.f32.mrb[0].mxu0
    %366 = vdwg.mxu0
    %367 = vmatprep.subr.mxu0 0.0
    %v368 = vand.u32 %v28, 4294901760
    %v369 = vsub.f32 %v28, %v368
    %v370 = vand.u32 %v369, 4294901760
    %371 = vmatpush1.msra.mxu0 %v370
    %372 = vmatprep.subr.mxu0 0.0
    %373 = vmatpush1.msra.mxu0 0.0
    %374 = vmatprep.subr.mxu0 0.0
    %375 = vmatpush1.msra.mxu0 0.0
    %376 = vmatprep.subr.mxu0 0.0
    %377 = vmatpush1.msra.mxu0 0.0
    %378 = vmatprep.subr.mxu0 0.0
    %379 = vmatpush1.msra.mxu0 0.0
    %380 = vmatprep.subr.mxu0 0.0
    %381 = vmatpush1.msra.mxu0 0.0
    %382 = vmatprep.subr.mxu0 0.0
    %383 = vmatpush1.msra.mxu0 0.0
    %384 = vmatprep.subr.mxu0 0.0
    %385 = vmatpush1.msra.mxu0 0.0
    %386 = vmatprep.subr.mxu0 0.0
    %387 = vmatpush1.msra.mxu0 0.0
    %388 = vmatprep.subr.mxu0 0.0
    %389 = vmatpush1.msra.mxu0 0.0
    %390 = vmatprep.subr.mxu0 0.0
    %391 = vmatpush1.msra.mxu0 0.0
    %392 = vmatprep.subr.mxu0 0.0
    %393 = vmatpush1.msra.mxu0 0.0
    %394 = vmatprep.subr.mxu0 0.0
    %395 = vmatpush1.msra.mxu0 0.0
    %396 = vmatprep.subr.mxu0 0.0
    %397 = vmatpush1.msra.mxu0 0.0
    %398 = vmatprep.subr.mxu0 0.0
    %399 = vmatpush1.msra.mxu0 0.0
    %400 = vmatprep.subr.mxu0 0.0
    %401 = vmatpush1.msra.mxu0 0.0
    %402 = vmatprep.subr.mxu0 0.0
    %403 = vmatpush1.msra.mxu0 0.0
    %404 = vmatprep.subr.mxu0 0.0
    %405 = vmatpush1.msra.mxu0 0.0
    %406 = vmatprep.subr.mxu0 0.0
    %407 = vmatpush1.msra.mxu0 0.0
    %408 = vmatprep.subr.mxu0 0.0
    %409 = vmatpush1.msra.mxu0 0.0
    %410 = vmatprep.subr.mxu0 0.0
    %411 = vmatpush1.msra.mxu0 0.0
    %412 = vmatprep.subr.mxu0 0.0
    %413 = vmatpush1.msra.mxu0 0.0
    %414 = vmatprep.subr.mxu0 0.0
    %415 = vmatpush1.msra.mxu0 0.0
    %416 = vmatprep.subr.mxu0 0.0
    %417 = vmatpush1.msra.mxu0 0.0
    %418 = vmatprep.subr.mxu0 0.0
    %419 = vmatpush1.msra.mxu0 0.0
    %420 = vmatprep.subr.mxu0 0.0
    %421 = vmatpush1.msra.mxu0 0.0
    %422 = vmatprep.subr.mxu0 0.0
    %423 = vmatpush1.msra.mxu0 0.0
    %424 = vmatprep.subr.mxu0 0.0
    %425 = vmatpush1.msra.mxu0 0.0
    %426 = vmatprep.subr.mxu0 0.0
    %427 = vmatpush1.msra.mxu0 0.0
    %428 = vmatprep.subr.mxu0 0.0
    %429 = vmatpush1.msra.mxu0 0.0
    %430 = vmatprep.subr.mxu0 0.0
    %431 = vmatpush1.msra.mxu0 0.0
    %432 = vmatprep.subr.mxu0 0.0
    %433 = vmatpush1.msra.mxu0 0.0
    %434 = vmatprep.mubr.f32.mxu0 0.0
    %v435 = vand.u32 %v31, 4294901760
    %436 = vmatmul.mubr.f32.gmra.mrb[0].mxu0 %v435
    %v437 = vpop.f32.mrb[0].mxu0
    %v438 = vadd.f32 %v356, %v437
    %v439 = vpop.f32.mrb[0].mxu0
    %440 = vmatprep.mubr.f32.mxu0 0.0
    %v441 = vand.u32 %v34, 4294901760
    %442 = vmatmul.mubr.f32.gmra.mrb[0].mxu0 %v441
    %v443 = vpop.f32.mrb[0].mxu0
    %v444 = vadd.f32 %v364, %v443
    %v445 = vpop.f32.mrb[0].mxu0
    %446 = vdwg.mxu0
    %447 = vmatprep.subr.mxu0 0.0
    %v448 = vand.u32 %v28, 4294901760
    %449 = vmatpush1.msra.mxu0 %v448
    %450 = vmatprep.subr.mxu0 0.0
    %451 = vmatpush1.msra.mxu0 0.0
    %452 = vmatprep.subr.mxu0 0.0
    %453 = vmatpush1.msra.mxu0 0.0
    %454 = vmatprep.subr.mxu0 0.0
    %455 = vmatpush1.msra.mxu0 0.0
    %456 = vmatprep.subr.mxu0 0.0
    %457 = vmatpush1.msra.mxu0 0.0
    %458 = vmatprep.subr.mxu0 0.0
    %459 = vmatpush1.msra.mxu0 0.0
    %460 = vmatprep.subr.mxu0 0.0
    %461 = vmatpush1.msra.mxu0 0.0
    %462 = vmatprep.subr.mxu0 0.0
    %463 = vmatpush1.msra.mxu0 0.0
    %464 = vmatprep.subr.mxu0 0.0
    %465 = vmatpush1.msra.mxu0 0.0
    %466 = vmatprep.subr.mxu0 0.0
    %467 = vmatpush1.msra.mxu0 0.0
    %468 = vmatprep.subr.mxu0 0.0
    %469 = vmatpush1.msra.mxu0 0.0
    %470 = vmatprep.subr.mxu0 0.0
    %471 = vmatpush1.msra.mxu0 0.0
    %472 = vmatprep.subr.mxu0 0.0
    %473 = vmatpush1.msra.mxu0 0.0
    %474 = vmatprep.subr.mxu0 0.0
    %475 = vmatpush1.msra.mxu0 0.0
    %476 = vmatprep.subr.mxu0 0.0
    %477 = vmatpush1.msra.mxu0 0.0
    %478 = vmatprep.subr.mxu0 0.0
    %479 = vmatpush1.msra.mxu0 0.0
    %480 = vmatprep.subr.mxu0 0.0
    %481 = vmatpush1.msra.mxu0 0.0
    %482 = vmatprep.subr.mxu0 0.0
    %483 = vmatpush1.msra.mxu0 0.0
    %484 = vmatprep.subr.mxu0 0.0
    %485 = vmatpush1.msra.mxu0 0.0
    %486 = vmatprep.subr.mxu0 0.0
    %487 = vmatpush1.msra.mxu0 0.0
    %488 = vmatprep.subr.mxu0 0.0
    %489 = vmatpush1.msra.mxu0 0.0
    %490 = vmatprep.subr.mxu0 0.0
    %491 = vmatpush1.msra.mxu0 0.0
    %492 = vmatprep.subr.mxu0 0.0
    %493 = vmatpush1.msra.mxu0 0.0
    %494 = vmatprep.subr.mxu0 0.0
    %495 = vmatpush1.msra.mxu0 0.0
    %496 = vmatprep.subr.mxu0 0.0
    %497 = vmatpush1.msra.mxu0 0.0
    %498 = vmatprep.subr.mxu0 0.0
    %499 = vmatpush1.msra.mxu0 0.0
    %500 = vmatprep.subr.mxu0 0.0
    %501 = vmatpush1.msra.mxu0 0.0
    %502 = vmatprep.subr.mxu0 0.0
    %503 = vmatpush1.msra.mxu0 0.0
    %504 = vmatprep.subr.mxu0 0.0
    %505 = vmatpush1.msra.mxu0 0.0
    %506 = vmatprep.subr.mxu0 0.0
    %507 = vmatpush1.msra.mxu0 0.0
    %508 = vmatprep.subr.mxu0 0.0
    %509 = vmatpush1.msra.mxu0 0.0
    %510 = vmatprep.subr.mxu0 0.0
    %511 = vmatpush1.msra.mxu0 0.0
    %512 = vmatprep.mubr.f32.mxu0 0.0
    %v513 = vand.u32 %v31, 4294901760
    %514 = vmatmul.mubr.f32.gmra.mrb[0].mxu0 %v513
    %v515 = vpop.f32.mrb[0].mxu0
    %v516 = vadd.f32 %v438, %v515
    %v517 = vpop.f32.mrb[0].mxu0
    %518 = vmatprep.mubr.f32.mxu0 0.0
    %v519 = vand.u32 %v34, 4294901760
    %520 = vmatmul.mubr.f32.gmra.mrb[0].mxu0 %v519
    %v521 = vpop.f32.mrb[0].mxu0
    %v522 = vadd.f32 %v444, %v521
    %v523 = vpop.f32.mrb[0].mxu0
    %524 = vdwg.mxu0
    %525 = vst [vmem:[#allocation2] sm:$0xff] %v516
    %526 = vst [vmem:[#allocation2 + $0x8] sm:$0xff] %v522
    // Predicated region
    $region10: #{tpu_custom_call.1} parent=1 // pred_check
      _
    $region11: #{tpu_custom_call.1} parent=1 // pred_check_branch
      %528 = sbr.rel (0) target = $region13
    $region12: #{tpu_custom_call.1} parent=1 // pred_region
      %s530 = ssub.s32 256, 256
      %531 = vsyncadd [#allocation3], %s530
      %s532 = sshll.u32 [#allocation2], 4
      %s533 = int_to_ptr.vmem [resolvable:$true] %s532
      %538 = dma.vmem_to_hbm [thread:$0]  %s533, 256, %s2, [#allocation3], 128, 128, 8
    $region13: #{tpu_custom_call.1} parent=1 // pred_fallthru
      _
    // Predicated region
    $region14: #{tpu_custom_call.1} parent=1 // pred_check
      _
    $region15: #{tpu_custom_call.1} parent=1 // pred_check_branch
      %540 = sbr.rel (0) target = $region17
    $region16: #{tpu_custom_call.1} parent=1 // pred_region
      %541 = dma.done [#allocation3], 256
    $region17: #{tpu_custom_call.1} parent=1 // pred_fallthru
      _
    %542 = vsyncpa [#allocation3], 1

</llo_original>
